<compile_context>
chip_gen: v7x
topology: tpu7x:2x2x1
jax: 0.10.0
libtpu: 0.0.40
codegen_flags: <defaults>
</compile_context>

<pallas_src>
import jax
import jax.numpy as jnp
from jax.experimental import pallas as pl
from jax.experimental.pallas import tpu as pltpu


def _make_residual_kernel(n_layer, has_id_conv, post_gain, L, kernel_sizes,
                          batch_tile, matmul_dtype):
    """Builds kernel: refs = (x, [id_w, id_b], conv_w_0..conv_w_{n-1}, out)."""

    def dot_f32(a, b):
        return jnp.dot(a.astype(matmul_dtype), b.astype(matmul_dtype),
                       preferred_element_type=jnp.float32)

    def kernel(*refs):
        idx = 0
        x_ref = refs[idx]; idx += 1                     # (BT, C_in, L)

        if has_id_conv:
            wid = refs[idx][...]; idx += 1              # (n_out, C_in)
            bid = refs[idx][...]; idx += 1              # (n_out, 1), f32

        conv_ws = []
        for _ in range(n_layer):
            conv_ws.append(refs[idx][...]); idx += 1    # (k, c_out, c_in)
        o_ref = refs[idx]                               # (BT, n_out, L)

        # Lane index, reused by every k=3 edge mask.
        lane = jax.lax.broadcasted_iota(jnp.int32, (1, L), 1)

        for b in range(batch_tile):                     # static unroll
            x = x_ref[b].astype(jnp.float32)            # (C_in, L)

            # ---- identity path: 1x1 conv with bias (or identity) ----
            if has_id_conv:
                id_out = dot_f32(wid, x) + bid          # (n_out, L)
            else:
                id_out = x

            # ---- residual path: [ReLU -> Conv1d(k=3)]*(n-1) -> ReLU -> Conv1d(k=1) ----
            h = x
            for i in range(n_layer):
                h = jnp.maximum(h, 0.0)                 # ReLU (f32, VPU)
                w = conv_ws[i]                          # (k, c_out, c_in)
                k = kernel_sizes[i]
                if k == 1:
                    h = dot_f32(w[0], h)
                else:
                    pad = (k - 1) // 2
                    # Center tap first: initializes the accumulator, no zero-fill.
                    acc = dot_f32(w[pad], h)
                    for dk in range(k):                 # static unroll over taps
                        if dk == pad:
                            continue
                        # out[:, l] += w[dk] @ h[:, l + dk - pad]  (zero outside)
                        shift = pad - dk                # +1 for dk=0, -1 for dk=2
                        hs = pltpu.roll(h, shift % L, 1)
                        if shift > 0:
                            mask = lane >= shift        # wrapped head lanes -> 0
                        else:
                            mask = lane < (L + shift)   # wrapped tail lanes -> 0
                        hs = jnp.where(mask, hs, 0.0)
                        acc = acc + dot_f32(w[dk], hs)
                    h = acc

            o_ref[b] = (id_out + post_gain * h).astype(o_ref.dtype)

    return kernel


def residual_forward_pallas(x_ncl, params, post_gain, *,
                            batch_tile=1, matmul_dtype=jnp.float32):
    """x_ncl: (B, C_in, L) float32, PyTorch Conv1d layout. Returns (B, n_out, L)."""
    B, C_in, L = x_ncl.shape
    assert B % batch_tile == 0, "batch must be divisible by batch_tile"
    has_id_conv = params["id_w"] is not None

    kernel_inputs = [x_ncl]
    in_specs = [pl.BlockSpec((batch_tile, C_in, L), lambda g: (g, 0, 0))]

    if has_id_conv:
        # Conv1d(n_in, n_out, 1) weight (n_out, n_in, 1) -> (n_out, n_in), no
        # activation-layout change needed for the (C, L) orientation.
        id_w = params["id_w"][:, :, 0].astype(matmul_dtype)
        id_b = params["id_b"].reshape(-1, 1).astype(jnp.float32)   # (n_out, 1)
        kernel_inputs += [id_w, id_b]
        in_specs += [
            pl.BlockSpec(id_w.shape, lambda g: (0, 0)),
            pl.BlockSpec(id_b.shape, lambda g: (0, 0)),
        ]

    kernel_sizes = []
    for w, k in params["convs"]:
        # (c_out, c_in, k) -> (k, c_out, c_in): one (c_out, c_in) matrix per tap.
        w_t = jnp.transpose(w, (2, 0, 1)).astype(matmul_dtype)
        kernel_inputs.append(w_t)
        in_specs.append(pl.BlockSpec(w_t.shape, lambda g: (0, 0, 0)))
        kernel_sizes.append(k)

    n_out = params["convs"][-1][0].shape[0]
    n_layer = len(params["convs"])

    kernel = _make_residual_kernel(n_layer, has_id_conv, float(post_gain), L,
                                   tuple(kernel_sizes), batch_tile, matmul_dtype)

    return pl.pallas_call(
        kernel,
        out_shape=jax.ShapeDtypeStruct((B, n_out, L), x_ncl.dtype),
        grid=(B // batch_tile,),
        in_specs=in_specs,
        out_specs=pl.BlockSpec((batch_tile, n_out, L), lambda g: (g, 0, 0)),
        compiler_params=pltpu.CompilerParams(dimension_semantics=("parallel",)),
    )(*kernel_inputs)


def residual_forward_ref(x_ncl, params, post_gain):
    """Pure-JAX reference using lax conv (matches PyTorch Conv1d semantics)."""
    dimnums = ("NCH", "OIH", "NCH")
    if params["id_w"] is not None:
        idp = jax.lax.conv_general_dilated(
            x_ncl, params["id_w"], window_strides=(1,), padding=[(0, 0)],
            dimension_numbers=dimnums) + params["id_b"][None, :, None]
    else:
        idp = x_ncl
    h = x_ncl
    for w, k in params["convs"]:
        h = jnp.maximum(h, 0.0)
        pad = (k - 1) // 2
        h = jax.lax.conv_general_dilated(
            h, w, window_strides=(1,), padding=[(pad, pad)],
            dimension_numbers=dimnums)
    return idp + post_gain * h


def init_residual_params(key, n_in, n_hid, n_out, n_layer):
    """Deterministic synthetic params with the shapes Residual.__init__ implies."""
    keys = jax.random.split(key, 2 + n_layer)
    params = {}
    if n_in != n_out:
        # id_path = Conv1d(n_in, n_out, k=1, bias=True)
        params["id_w"] = 0.2 * jax.random.normal(keys[0], (n_out, n_in, 1), jnp.float32)
        params["id_b"] = 0.1 * jax.random.normal(keys[1], (n_out,), jnp.float32)
    else:
        params["id_w"] = None
        params["id_b"] = None
    convs = []
    c_in = n_in
    for i in range(n_layer):
        if i != n_layer - 1:
            k, c_out = 3, n_hid           # Conv1d(c_in, n_hid, 3, pad=1, bias=False)
        else:
            k, c_out = 1, n_out           # Conv1d(c_in, n_out, 1, pad=0, bias=False)
        scale = 1.0 / float(c_in * k) ** 0.5
        w = scale * jax.random.normal(keys[2 + i], (c_out, c_in, k), jnp.float32)
        convs.append((w, k))
        c_in = c_out
    params["convs"] = convs
    return params


if __name__ == "__main__":
    # Small shapes consistent with the module; L chosen lane-dense (multiple of 128).
    B, n_in, n_hid, n_out, n_layer, L = 2, 4, 32, 8, 3, 128
    post_gain = 1.0

    key = jax.random.PRNGKey(0)
    kx, kp = jax.random.split(key)
    x = jax.random.normal(kx, (B, n_in, L), jnp.float32)       # PyTorch NCL layout
    params = init_residual_params(kp, n_in, n_hid, n_out, n_layer)

    # batch_tile=1 keeps 2 parallel grid steps (one per v7x TensorCore at B=2);
    # matmul_dtype=jnp.bfloat16 is the recommended v6e/v7x setting at real sizes.
    out = residual_forward_pallas(x, params, post_gain,
                                  batch_tile=1, matmul_dtype=jnp.float32)
    out = jax.block_until_ready(out)

    ref = residual_forward_ref(x, params, post_gain)
    assert out.shape == (B, n_out, L), out.shape
    assert bool(jnp.allclose(out, ref, atol=2e-3, rtol=2e-3)), "mismatch vs reference"

    print("KERNEL_OK")
</pallas_src>

<mosaic_0001>
module attributes {stable_mosaic.version = 11 : i64} {
  func.func @kernel(%arg0: i32, %arg1: memref<1x4x128xf32, #tpu.memory_space<vmem>>, %arg2: memref<8x4xf32, #tpu.memory_space<vmem>>, %arg3: memref<8x1xf32, #tpu.memory_space<vmem>>, %arg4: memref<3x32x4xf32, #tpu.memory_space<vmem>>, %arg5: memref<3x32x32xf32, #tpu.memory_space<vmem>>, %arg6: memref<1x8x32xf32, #tpu.memory_space<vmem>>, %arg7: memref<1x8x128xf32, #tpu.memory_space<vmem>>) attributes {dimension_semantics = [#tpu.dimension_semantics<parallel>], iteration_bounds = array<i64: 2>, scalar_prefetch = 0 : i64, scratch_operands = 0 : i64, tpu.core_type = #tpu.core_type<tc>, window_params = [{transform_indices = @transform_0, window_bounds = array<i64: 1, 4, 128>}, {pipeline_mode = #tpu.pipeline_mode<synchronous>, transform_indices = @transform_1, window_bounds = array<i64: 8, 4>}, {pipeline_mode = #tpu.pipeline_mode<synchronous>, transform_indices = @transform_2, window_bounds = array<i64: 8, 1>}, {pipeline_mode = #tpu.pipeline_mode<synchronous>, transform_indices = @transform_3, window_bounds = array<i64: 3, 32, 4>}, {pipeline_mode = #tpu.pipeline_mode<synchronous>, transform_indices = @transform_4, window_bounds = array<i64: 3, 32, 32>}, {pipeline_mode = #tpu.pipeline_mode<synchronous>, transform_indices = @transform_5, window_bounds = array<i64: 1, 8, 32>}, {transform_indices = @transform_6, window_bounds = array<i64: 1, 8, 128>}]} {
    %c0 = arith.constant 0 : index
    %c0_0 = arith.constant 0 : index
    %0 = vector.load %arg2[%c0, %c0_0] : memref<8x4xf32, #tpu.memory_space<vmem>>, vector<8x4xf32>
    %c0_1 = arith.constant 0 : index
    %c0_2 = arith.constant 0 : index
    %1 = vector.load %arg3[%c0_1, %c0_2] : memref<8x1xf32, #tpu.memory_space<vmem>>, vector<8x1xf32>
    %c0_3 = arith.constant 0 : index
    %c0_4 = arith.constant 0 : index
    %c0_5 = arith.constant 0 : index
    %2 = vector.load %arg4[%c0_3, %c0_4, %c0_5] : memref<3x32x4xf32, #tpu.memory_space<vmem>>, vector<3x32x4xf32>
    %c0_6 = arith.constant 0 : index
    %c0_7 = arith.constant 0 : index
    %c0_8 = arith.constant 0 : index
    %3 = vector.load %arg5[%c0_6, %c0_7, %c0_8] : memref<3x32x32xf32, #tpu.memory_space<vmem>>, vector<3x32x32xf32>
    %c0_9 = arith.constant 0 : index
    %c0_10 = arith.constant 0 : index
    %c0_11 = arith.constant 0 : index
    %4 = vector.load %arg6[%c0_9, %c0_10, %c0_11] : memref<1x8x32xf32, #tpu.memory_space<vmem>>, vector<1x8x32xf32>
    %5 = tpu.iota {dimensions = array<i32: 1>} : vector<1x128xi32>
    %c0_12 = arith.constant 0 : index
    %c0_13 = arith.constant 0 : index
    %c0_14 = arith.constant 0 : index
    %6 = vector.load %arg1[%c0_12, %c0_13, %c0_14] : memref<1x4x128xf32, #tpu.memory_space<vmem>>, vector<1x4x128xf32>
    %7 = vector.shape_cast %6 : vector<1x4x128xf32> to vector<4x128xf32>
    %cst = arith.constant dense<0.000000e+00> : vector<8x128xf32>
    %8 = tpu.matmul %0, %7, %cst {dimension_numbers = #tpu.dot_dimension_numbers<[1], [0], [0], [1], [0, 0, 1, 1], [], []>} : vector<8x4xf32>, vector<4x128xf32>, vector<8x128xf32> -> vector<8x128xf32>
    %9 = vector.broadcast %1 : vector<8x1xf32> to vector<8x128xf32>
    %10 = arith.addf %8, %9 : vector<8x128xf32>
    %cst_15 = arith.constant 0.000000e+00 : f32
    %11 = vector.broadcast %cst_15 : f32 to vector<4x128xf32>
    %12 = arith.maximumf %7, %11 : vector<4x128xf32>
    %13 = vector.extract_strided_slice %2 {offsets = [1, 0, 0], sizes = [1, 32, 4], strides = [1, 1, 1]} : vector<3x32x4xf32> to vector<1x32x4xf32>
    %14 = vector.shape_cast %13 : vector<1x32x4xf32> to vector<32x4xf32>
    %cst_16 = arith.constant dense<0.000000e+00> : vector<32x128xf32>
    %15 = tpu.matmul %14, %12, %cst_16 {dimension_numbers = #tpu.dot_dimension_numbers<[1], [0], [0], [1], [0, 0, 1, 1], [], []>} : vector<32x4xf32>, vector<4x128xf32>, vector<32x128xf32> -> vector<32x128xf32>
    %c1_i32 = arith.constant 1 : i32
    %16 = tpu.dynamic_rotate %12 by %c1_i32 dim 1 : vector<4x128xf32>, i32 -> vector<4x128xf32>
    %c1_i32_17 = arith.constant 1 : i32
    %17 = vector.broadcast %c1_i32_17 : i32 to vector<1x128xi32>
    %18 = arith.cmpi sge, %5, %17 : vector<1x128xi32>
    %cst_18 = arith.constant 0.000000e+00 : f32
    %19 = vector.shape_cast %18 : vector<1x128xi1> to vector<1x128xi1>
    %20 = vector.broadcast %19 : vector<1x128xi1> to vector<4x128xi1>
    %21 = vector.broadcast %cst_18 : f32 to vector<4x128xf32>
    %22 = arith.select %20, %16, %21 : vector<4x128xi1>, vector<4x128xf32>
    %23 = vector.extract_strided_slice %2 {offsets = [0, 0, 0], sizes = [1, 32, 4], strides = [1, 1, 1]} : vector<3x32x4xf32> to vector<1x32x4xf32>
    %24 = vector.shape_cast %23 : vector<1x32x4xf32> to vector<32x4xf32>
    %cst_19 = arith.constant dense<0.000000e+00> : vector<32x128xf32>
    %25 = tpu.matmul %24, %22, %cst_19 {dimension_numbers = #tpu.dot_dimension_numbers<[1], [0], [0], [1], [0, 0, 1, 1], [], []>} : vector<32x4xf32>, vector<4x128xf32>, vector<32x128xf32> -> vector<32x128xf32>
    %26 = arith.addf %15, %25 : vector<32x128xf32>
    %c127_i32 = arith.constant 127 : i32
    %27 = tpu.dynamic_rotate %12 by %c127_i32 dim 1 : vector<4x128xf32>, i32 -> vector<4x128xf32>
    %c127_i32_20 = arith.constant 127 : i32
    %28 = vector.broadcast %c127_i32_20 : i32 to vector<1x128xi32>
    %29 = arith.cmpi slt, %5, %28 : vector<1x128xi32>
    %cst_21 = arith.constant 0.000000e+00 : f32
    %30 = vector.shape_cast %29 : vector<1x128xi1> to vector<1x128xi1>
    %31 = vector.broadcast %30 : vector<1x128xi1> to vector<4x128xi1>
    %32 = vector.broadcast %cst_21 : f32 to vector<4x128xf32>
    %33 = arith.select %31, %27, %32 : vector<4x128xi1>, vector<4x128xf32>
    %34 = vector.extract_strided_slice %2 {offsets = [2, 0, 0], sizes = [1, 32, 4], strides = [1, 1, 1]} : vector<3x32x4xf32> to vector<1x32x4xf32>
    %35 = vector.shape_cast %34 : vector<1x32x4xf32> to vector<32x4xf32>
    %cst_22 = arith.constant dense<0.000000e+00> : vector<32x128xf32>
    %36 = tpu.matmul %35, %33, %cst_22 {dimension_numbers = #tpu.dot_dimension_numbers<[1], [0], [0], [1], [0, 0, 1, 1], [], []>} : vector<32x4xf32>, vector<4x128xf32>, vector<32x128xf32> -> vector<32x128xf32>
    %37 = arith.addf %26, %36 : vector<32x128xf32>
    %cst_23 = arith.constant 0.000000e+00 : f32
    %38 = vector.broadcast %cst_23 : f32 to vector<32x128xf32>
    %39 = arith.maximumf %37, %38 : vector<32x128xf32>
    %40 = vector.extract_strided_slice %3 {offsets = [1, 0, 0], sizes = [1, 32, 32], strides = [1, 1, 1]} : vector<3x32x32xf32> to vector<1x32x32xf32>
    %41 = vector.shape_cast %40 : vector<1x32x32xf32> to vector<32x32xf32>
    %cst_24 = arith.constant dense<0.000000e+00> : vector<32x128xf32>
    %42 = tpu.matmul %41, %39, %cst_24 {dimension_numbers = #tpu.dot_dimension_numbers<[1], [0], [0], [1], [0, 0, 1, 1], [], []>} : vector<32x32xf32>, vector<32x128xf32>, vector<32x128xf32> -> vector<32x128xf32>
    %c1_i32_25 = arith.constant 1 : i32
    %43 = tpu.dynamic_rotate %39 by %c1_i32_25 dim 1 : vector<32x128xf32>, i32 -> vector<32x128xf32>
    %c1_i32_26 = arith.constant 1 : i32
    %44 = vector.broadcast %c1_i32_26 : i32 to vector<1x128xi32>
    %45 = arith.cmpi sge, %5, %44 : vector<1x128xi32>
    %cst_27 = arith.constant 0.000000e+00 : f32
    %46 = vector.shape_cast %45 : vector<1x128xi1> to vector<1x128xi1>
    %47 = vector.broadcast %46 : vector<1x128xi1> to vector<32x128xi1>
    %48 = vector.broadcast %cst_27 : f32 to vector<32x128xf32>
    %49 = arith.select %47, %43, %48 : vector<32x128xi1>, vector<32x128xf32>
    %50 = vector.extract_strided_slice %3 {offsets = [0, 0, 0], sizes = [1, 32, 32], strides = [1, 1, 1]} : vector<3x32x32xf32> to vector<1x32x32xf32>
    %51 = vector.shape_cast %50 : vector<1x32x32xf32> to vector<32x32xf32>
    %cst_28 = arith.constant dense<0.000000e+00> : vector<32x128xf32>
    %52 = tpu.matmul %51, %49, %cst_28 {dimension_numbers = #tpu.dot_dimension_numbers<[1], [0], [0], [1], [0, 0, 1, 1], [], []>} : vector<32x32xf32>, vector<32x128xf32>, vector<32x128xf32> -> vector<32x128xf32>
    %53 = arith.addf %42, %52 : vector<32x128xf32>
    %c127_i32_29 = arith.constant 127 : i32
    %54 = tpu.dynamic_rotate %39 by %c127_i32_29 dim 1 : vector<32x128xf32>, i32 -> vector<32x128xf32>
    %c127_i32_30 = arith.constant 127 : i32
    %55 = vector.broadcast %c127_i32_30 : i32 to vector<1x128xi32>
    %56 = arith.cmpi slt, %5, %55 : vector<1x128xi32>
    %cst_31 = arith.constant 0.000000e+00 : f32
    %57 = vector.shape_cast %56 : vector<1x128xi1> to vector<1x128xi1>
    %58 = vector.broadcast %57 : vector<1x128xi1> to vector<32x128xi1>
    %59 = vector.broadcast %cst_31 : f32 to vector<32x128xf32>
    %60 = arith.select %58, %54, %59 : vector<32x128xi1>, vector<32x128xf32>
    %61 = vector.extract_strided_slice %3 {offsets = [2, 0, 0], sizes = [1, 32, 32], strides = [1, 1, 1]} : vector<3x32x32xf32> to vector<1x32x32xf32>
    %62 = vector.shape_cast %61 : vector<1x32x32xf32> to vector<32x32xf32>
    %cst_32 = arith.constant dense<0.000000e+00> : vector<32x128xf32>
    %63 = tpu.matmul %62, %60, %cst_32 {dimension_numbers = #tpu.dot_dimension_numbers<[1], [0], [0], [1], [0, 0, 1, 1], [], []>} : vector<32x32xf32>, vector<32x128xf32>, vector<32x128xf32> -> vector<32x128xf32>
    %64 = arith.addf %53, %63 : vector<32x128xf32>
    %cst_33 = arith.constant 0.000000e+00 : f32
    %65 = vector.broadcast %cst_33 : f32 to vector<32x128xf32>
    %66 = arith.maximumf %64, %65 : vector<32x128xf32>
    %67 = vector.shape_cast %4 : vector<1x8x32xf32> to vector<8x32xf32>
    %cst_34 = arith.constant dense<0.000000e+00> : vector<8x128xf32>
    %68 = tpu.matmul %67, %66, %cst_34 {dimension_numbers = #tpu.dot_dimension_numbers<[1], [0], [0], [1], [0, 0, 1, 1], [], []>} : vector<8x32xf32>, vector<32x128xf32>, vector<8x128xf32> -> vector<8x128xf32>
    %cst_35 = arith.constant 1.000000e+00 : f32
    %69 = vector.broadcast %cst_35 : f32 to vector<8x128xf32>
    %70 = arith.mulf %69, %68 : vector<8x128xf32>
    %71 = arith.addf %10, %70 : vector<8x128xf32>
    %c0_36 = arith.constant 0 : index
    %c0_37 = arith.constant 0 : index
    %c0_38 = arith.constant 0 : index
    %72 = vector.load %arg7[%c0_36, %c0_37, %c0_38] : memref<1x8x128xf32, #tpu.memory_space<vmem>>, vector<1x8x128xf32>
    %73 = vector.shape_cast %72 : vector<1x8x128xf32> to vector<8x128xf32>
    %74 = vector.shape_cast %71 : vector<8x128xf32> to vector<1x8x128xf32>
    tpu.vector_store %arg7[%c0_36, %c0_37, %c0_38], %74 {strides = array<i32>} : memref<1x8x128xf32, #tpu.memory_space<vmem>>, vector<1x8x128xf32>,
    return
  }
  func.func @transform_0(%arg0: i32) -> (i32, i32, i32) {
    %c0_i32 = arith.constant 0 : i32
    %c0_i32_0 = arith.constant 0 : i32
    %c0_i32_1 = arith.constant 0 : i32
    return %arg0, %c0_i32, %c0_i32_0 : i32, i32, i32
  }
  func.func @transform_1(%arg0: i32) -> (i32, i32) {
    %c0_i32 = arith.constant 0 : i32
    %c0_i32_0 = arith.constant 0 : i32
    %c0_i32_1 = arith.constant 0 : i32
    return %c0_i32, %c0_i32_0 : i32, i32
  }
  func.func @transform_2(%arg0: i32) -> (i32, i32) {
    %c0_i32 = arith.constant 0 : i32
    %c0_i32_0 = arith.constant 0 : i32
    %c0_i32_1 = arith.constant 0 : i32
    return %c0_i32, %c0_i32_0 : i32, i32
  }
  func.func @transform_3(%arg0: i32) -> (i32, i32, i32) {
    %c0_i32 = arith.constant 0 : i32
    %c0_i32_0 = arith.constant 0 : i32
    %c0_i32_1 = arith.constant 0 : i32
    %c0_i32_2 = arith.constant 0 : i32
    return %c0_i32, %c0_i32_0, %c0_i32_1 : i32, i32, i32
  }
  func.func @transform_4(%arg0: i32) -> (i32, i32, i32) {
    %c0_i32 = arith.constant 0 : i32
    %c0_i32_0 = arith.constant 0 : i32
    %c0_i32_1 = arith.constant 0 : i32
    %c0_i32_2 = arith.constant 0 : i32
    return %c0_i32, %c0_i32_0, %c0_i32_1 : i32, i32, i32
  }
  func.func @transform_5(%arg0: i32) -> (i32, i32, i32) {
    %c0_i32 = arith.constant 0 : i32
    %c0_i32_0 = arith.constant 0 : i32
    %c0_i32_1 = arith.constant 0 : i32
    %c0_i32_2 = arith.constant 0 : i32
    return %c0_i32, %c0_i32_0, %c0_i32_1 : i32, i32, i32
  }
  func.func @transform_6(%arg0: i32) -> (i32, i32, i32) {
    %c0_i32 = arith.constant 0 : i32
    %c0_i32_0 = arith.constant 0 : i32
    %c0_i32_1 = arith.constant 0 : i32
    return %arg0, %c0_i32, %c0_i32_0 : i32, i32, i32
  }
}

</mosaic_0001>

<llo_original>
// kernel: tpu_custom_call.1
$region0: #{tpu_custom_call.1}
  #allocation0 [shape = 'u32[]', space=smem, size = 0x4, offset = 0x4, fixed_abs, tag = 'smem constant byte address 0x4 - core index']
  #allocation1 [shape = 'u32[144,128]{1,0:T(1,128)}', space=vmem, size = 0x12000, scoped, tag = 'internal scratch']
  %s0 = inlined_call_operand.vmem [shape: f32[2,4,128], index: 0, kind: input, shape index: {}]
  %s1 = inlined_call_operand.vmem [shape: f32[8,4], index: 1, kind: input, shape index: {}]
  %s2 = inlined_call_operand.vmem [shape: f32[8,1], index: 2, kind: input, shape index: {}]
  %s3 = inlined_call_operand.vmem [shape: f32[3,32,4], index: 3, kind: input, shape index: {}]
  %s4 = inlined_call_operand.vmem [shape: f32[3,32,32], index: 4, kind: input, shape index: {}]
  %s5 = inlined_call_operand.vmem [shape: f32[1,8,32], index: 5, kind: input, shape index: {}]
  %s6 = inlined_call_operand.hbm [shape: f32[2,8,128], index: 6, kind: output, shape index: {}]
  %s7 = sld [smem:[#allocation0]]
  $region57: #{tpu_custom_call.1} parent=0
    _
  %s9 = ssub.s32 1, %s7
  %s10 = scalar_select 0, %s9, %s7
  $region1: #{tpu_custom_call.1} parent=0
    #allocation2 [shape = 'u8[8192]{0}', space=vmem, size = 0x2000, scoped, tag = 'output window, operand 0']
    #allocation3 [shape = 's32[2]{0}', space=sflag, size = 0x8, scoped, tag = 'scoped memory for tpu_custom_call.1']
    %11 = vsyncpa [#allocation3], 0
    %s12 = scalar_lea.sflag [#allocation3], 1
    %13 = vsyncpa %s12, 0
    loop: start=0, step=1, limit=4
    $region2: #{tpu_custom_call.1} parent=1 // loop_pre_header
      _
    $region3: #{tpu_custom_call.1} parent=1 // loop_header
      %s15 = sphi 0, %s19
      %p16 = scmp.ge.s32.totalorder %s15, 4
      %s25 = sphi 0, %s27
      %s28 = sphi 0, %s25
      %s29 = sphi 0, %s28
      %s45 = sphi 0, %s29
      %s49 = sphi 0, %s49
      %s51 = sphi 0, %s49
      %s52 = sphi 0, %s51
      %s66 = sphi 0, %s52
      %s70 = sphi 0, %s70
      %s72 = sphi 0, %s70
      %s73 = sphi 0, %s72
      %s87 = sphi 0, %s73
      %s91 = sphi 0, %s91
      %s93 = sphi 0, %s91
      %s94 = sphi 0, %s93
      %s108 = sphi 0, %s94
      %s112 = sphi 0, %s112
      %s114 = sphi 0, %s112
      %s115 = sphi 0, %s114
      %s129 = sphi 0, %s115
      %s133 = sphi 0, %s133
      %s135 = sphi 0, %s133
      %s136 = sphi 0, %s135
      %s150 = sphi 0, %s136
      %s156 = sphi 0, %s158
      %s159 = sphi 0, %s156
      %s160 = sphi 0, %s159
      %s176 = sphi 0, %s160
    $region4: #{tpu_custom_call.1} parent=1 // loop_header_branch
      %18 = sbr.rel (%p16) target = $region8
    $region5: #{tpu_custom_call.1} parent=1 // loop_body
      %s20 = ssub.s32 %s15, 1
      %s21 = ssub.s32 %s15, 2
      %s22 = sadd.s32 %s15, 1
      %s23 = ssub.s32 %s15, %s22
      %p24 = scmp.eq.s32.totalorder %s23, 0
      %s26 = sadd.s32 %s25, 1
      %s27 = scalar_select %p24, %s25, %s26
      %p30 = pneg %p24
      %p31 = scmp.eq.s32.totalorder %s15, 1
      %p32 = por %p30, %p31
      %p33 = scmp.ne.s32.totalorder %s25, %s28
      %p34 = scmp.eq.s32.totalorder %s15, 0
      %p35 = por %p33, %p34
      %p36 = scmp.ne.s32.totalorder %s25, %s28
      %p37 = scmp.eq.s32.totalorder %s20, 1
      %p38 = por %p36, %p37
      %p39 = scmp.ne.s32.totalorder %s28, %s29
      %p40 = scmp.eq.s32.totalorder %s20, 0
      %p41 = por %p39, %p40
      %p42 = scmp.ne.s32.totalorder %s28, %s29
      %p43 = scmp.eq.s32.totalorder %s21, 1
      %p44 = por %p42, %p43
      %p46 = scmp.ne.s32.totalorder %s29, %s45
      %p47 = scmp.eq.s32.totalorder %s21, 0
      %p48 = por %p46, %p47
      %s50 = sadd.s32 %s49, 1
      %p53 = scmp.eq.s32.totalorder %s15, 1
      %p54 = scmp.ne.s32.totalorder %s49, %s51
      %p55 = scmp.eq.s32.totalorder %s15, 0
      %p56 = por %p54, %p55
      %p57 = scmp.ne.s32.totalorder %s49, %s51
      %p58 = scmp.eq.s32.totalorder %s20, 1
      %p59 = por %p57, %p58
      %p60 = scmp.ne.s32.totalorder %s51, %s52
      %p61 = scmp.eq.s32.totalorder %s20, 0
      %p62 = por %p60, %p61
      %p63 = scmp.ne.s32.totalorder %s51, %s52
      %p64 = scmp.eq.s32.totalorder %s21, 1
      %p65 = por %p63, %p64
      %p67 = scmp.ne.s32.totalorder %s52, %s66
      %p68 = scmp.eq.s32.totalorder %s21, 0
      %p69 = por %p67, %p68
      %s71 = sadd.s32 %s70, 1
      %p74 = scmp.eq.s32.totalorder %s15, 1
      %p75 = scmp.ne.s32.totalorder %s70, %s72
      %p76 = scmp.eq.s32.totalorder %s15, 0
      %p77 = por %p75, %p76
      %p78 = scmp.ne.s32.totalorder %s70, %s72
      %p79 = scmp.eq.s32.totalorder %s20, 1
      %p80 = por %p78, %p79
      %p81 = scmp.ne.s32.totalorder %s72, %s73
      %p82 = scmp.eq.s32.totalorder %s20, 0
      %p83 = por %p81, %p82
      %p84 = scmp.ne.s32.totalorder %s72, %s73
      %p85 = scmp.eq.s32.totalorder %s21, 1
      %p86 = por %p84, %p85
      %p88 = scmp.ne.s32.totalorder %s73, %s87
      %p89 = scmp.eq.s32.totalorder %s21, 0
      %p90 = por %p88, %p89
      %s92 = sadd.s32 %s91, 1
      %p95 = scmp.eq.s32.totalorder %s15, 1
      %p96 = scmp.ne.s32.totalorder %s91, %s93
      %p97 = scmp.eq.s32.totalorder %s15, 0
      %p98 = por %p96, %p97
      %p99 = scmp.ne.s32.totalorder %s91, %s93
      %p100 = scmp.eq.s32.totalorder %s20, 1
      %p101 = por %p99, %p100
      %p102 = scmp.ne.s32.totalorder %s93, %s94
      %p103 = scmp.eq.s32.totalorder %s20, 0
      %p104 = por %p102, %p103
      %p105 = scmp.ne.s32.totalorder %s93, %s94
      %p106 = scmp.eq.s32.totalorder %s21, 1
      %p107 = por %p105, %p106
      %p109 = scmp.ne.s32.totalorder %s94, %s108
      %p110 = scmp.eq.s32.totalorder %s21, 0
      %p111 = por %p109, %p110
      %s113 = sadd.s32 %s112, 1
      %p116 = scmp.eq.s32.totalorder %s15, 1
      %p117 = scmp.ne.s32.totalorder %s112, %s114
      %p118 = scmp.eq.s32.totalorder %s15, 0
      %p119 = por %p117, %p118
      %p120 = scmp.ne.s32.totalorder %s112, %s114
      %p121 = scmp.eq.s32.totalorder %s20, 1
      %p122 = por %p120, %p121
      %p123 = scmp.ne.s32.totalorder %s114, %s115
      %p124 = scmp.eq.s32.totalorder %s20, 0
      %p125 = por %p123, %p124
      %p126 = scmp.ne.s32.totalorder %s114, %s115
      %p127 = scmp.eq.s32.totalorder %s21, 1
      %p128 = por %p126, %p127
      %p130 = scmp.ne.s32.totalorder %s115, %s129
      %p131 = scmp.eq.s32.totalorder %s21, 0
      %p132 = por %p130, %p131
      %s134 = sadd.s32 %s133, 1
      %p137 = scmp.eq.s32.totalorder %s15, 1
      %p138 = scmp.ne.s32.totalorder %s133, %s135
      %p139 = scmp.eq.s32.totalorder %s15, 0
      %p140 = por %p138, %p139
      %p141 = scmp.ne.s32.totalorder %s133, %s135
      %p142 = scmp.eq.s32.totalorder %s20, 1
      %p143 = por %p141, %p142
      %p144 = scmp.ne.s32.totalorder %s135, %s136
      %p145 = scmp.eq.s32.totalorder %s20, 0
      %p146 = por %p144, %p145
      %p147 = scmp.ne.s32.totalorder %s135, %s136
      %p148 = scmp.eq.s32.totalorder %s21, 1
      %p149 = por %p147, %p148
      %p151 = scmp.ne.s32.totalorder %s136, %s150
      %p152 = scmp.eq.s32.totalorder %s21, 0
      %p153 = por %p151, %p152
      %s154 = ssub.s32 %s15, %s22
      %p155 = scmp.eq.s32.totalorder %s154, 0
      %s157 = sadd.s32 %s156, 1
      %s158 = scalar_select %p155, %s156, %s157
      %p161 = pneg %p155
      %p162 = scmp.eq.s32.totalorder %s15, 1
      %p163 = por %p161, %p162
      %p164 = scmp.ne.s32.totalorder %s156, %s159
      %p165 = scmp.eq.s32.totalorder %s15, 0
      %p166 = por %p164, %p165
      %p167 = scmp.ne.s32.totalorder %s156, %s159
      %p168 = scmp.eq.s32.totalorder %s20, 1
      %p169 = por %p167, %p168
      %p170 = scmp.ne.s32.totalorder %s159, %s160
      %p171 = scmp.eq.s32.totalorder %s20, 0
      %p172 = por %p170, %p171
      %p173 = scmp.ne.s32.totalorder %s159, %s160
      %p174 = scmp.eq.s32.totalorder %s21, 1
      %p175 = por %p173, %p174
      %p177 = scmp.ne.s32.totalorder %s160, %s176
      %p178 = scmp.eq.s32.totalorder %s21, 0
      %p179 = por %p177, %p178
      %p180 = scmp.le.s32.totalorder 1, %s15
      %p181 = scmp.lt.s32.totalorder %s15, 3
      %p182 = pnand %p180, %p181
      %p183 = pneg %p182
      // Predicated region
      $region9: #{tpu_custom_call.1} parent=5 // pred_check
        _
      $region10: #{tpu_custom_call.1} parent=5 // pred_check_branch
        %185 = sbr.rel (%p182) target = $region12
      $region11: #{tpu_custom_call.1} parent=5 // pred_region
        %s186 = ssub.s32 %s15, 1
        // Predicated region
        $region13: #{tpu_custom_call.1} parent=11 // pred_check
          %p187 = pneg %p62
        $region14: #{tpu_custom_call.1} parent=11 // pred_check_branch
          %189 = sbr.rel (%p187) target = $region16
        $region15: #{tpu_custom_call.1} parent=11 // pred_region
          _
        $region16: #{tpu_custom_call.1} parent=11 // pred_fallthru
          _
        // Predicated region
        $region17: #{tpu_custom_call.1} parent=11 // pred_check
          %p190 = pneg %p83
        $region18: #{tpu_custom_call.1} parent=11 // pred_check_branch
          %192 = sbr.rel (%p190) target = $region20
        $region19: #{tpu_custom_call.1} parent=11 // pred_region
          _
        $region20: #{tpu_custom_call.1} parent=11 // pred_fallthru
          _
        // Predicated region
        $region21: #{tpu_custom_call.1} parent=11 // pred_check
          %p193 = pneg %p104
        $region22: #{tpu_custom_call.1} parent=11 // pred_check_branch
          %195 = sbr.rel (%p193) target = $region24
        $region23: #{tpu_custom_call.1} parent=11 // pred_region
          _
        $region24: #{tpu_custom_call.1} parent=11 // pred_fallthru
          _
        // Predicated region
        $region25: #{tpu_custom_call.1} parent=11 // pred_check
          %p196 = pneg %p125
        $region26: #{tpu_custom_call.1} parent=11 // pred_check_branch
          %198 = sbr.rel (%p196) target = $region28
        $region27: #{tpu_custom_call.1} parent=11 // pred_region
          _
        $region28: #{tpu_custom_call.1} parent=11 // pred_fallthru
          _
        // Predicated region
        $region29: #{tpu_custom_call.1} parent=11 // pred_check
          %p199 = pneg %p146
        $region30: #{tpu_custom_call.1} parent=11 // pred_check_branch
          %201 = sbr.rel (%p199) target = $region32
        $region31: #{tpu_custom_call.1} parent=11 // pred_region
          _
        $region32: #{tpu_custom_call.1} parent=11 // pred_fallthru
          _
      $region12: #{tpu_custom_call.1} parent=5 // pred_fallthru
        _
      %p202 = scmp.lt.s32.totalorder %s15, 2
      // Predicated region
      $region33: #{tpu_custom_call.1} parent=5 // pred_check
        %p203 = pneg %p202
      $region34: #{tpu_custom_call.1} parent=5 // pred_check_branch
        %205 = sbr.rel (%p203) target = $region36
      $region35: #{tpu_custom_call.1} parent=5 // pred_region
        // Predicated region
        $region37: #{tpu_custom_call.1} parent=35 // pred_check
          %p206 = pneg %p35
        $region38: #{tpu_custom_call.1} parent=35 // pred_check_branch
          %208 = sbr.rel (%p206) target = $region40
        $region39: #{tpu_custom_call.1} parent=35 // pred_region
          %p209 = scmp.lt.s32.totalorder %s15, 1
          %s210 = scalar_select %p209, %s15, 1
          %s211 = smul.addr %s210, 4
          %s212 = scalar_lea.vmem %s0, %s211
        $region40: #{tpu_custom_call.1} parent=35 // pred_fallthru
          _
      $region36: #{tpu_custom_call.1} parent=5 // pred_fallthru
        _
      %p213 = scmp.le.s32.totalorder 1, %s15
      %p214 = scmp.lt.s32.totalorder %s15, 3
      %p215 = pnand %p213, %p214
      %p216 = pneg %p215
      // Predicated region
      $region41: #{tpu_custom_call.1} parent=5 // pred_check
        _
      $region42: #{tpu_custom_call.1} parent=5 // pred_check_branch
        %218 = sbr.rel (%p215) target = $region44
      $region43: #{tpu_custom_call.1} parent=5 // pred_region
        %s219 = ssub.s32 %s15, 1
        %p220 = scmp.lt.s32.totalorder %s20, 1
        %s221 = scalar_select %p220, %s20, 1
        %s222 = smul.addr %s221, 4
        %s223 = scalar_lea.vmem %s0, %s222
        %p224 = pneg %p41
        %p225 = pneg %p38
        %p226 = pneg %p62
        %p227 = pneg %p59
        %p228 = pneg %p83
        %p229 = pneg %p80
        %p230 = pneg %p104
        %p231 = pneg %p101
        %p232 = pneg %p125
        %p233 = pneg %p122
        %p234 = pneg %p146
        %p235 = pneg %p143
        %p236 = pneg %p172
        %p237 = pneg %p169
        %s238 = sand.u32 %s159, 1
        %s239 = scalar_lea.sflag [#allocation3], %s238
        %s240 = sand.u32 %s159, 1
        %s241 = smul.addr %s240, 8
        %s242 = scalar_lea.vmem [#allocation2], %s241
        %p243 = scmp.lt.s32.totalorder %s20, 1
        %s244 = scalar_select %p243, %s20, 1
        %s245 = smul.addr %s244, 4
        %s246 = scalar_lea.vmem %s0, %s245
        %v247 = vld [vmem:[%s1] sm:$0xff]
        %v248 = vld [vmem:[%s2] sm:$0xff]
        %v249 = vld [vmem:[%s3] sm:$0xff]
        %v250 = vld [vmem:[%s3 + $0x8] sm:$0xff]
        %v251 = vld [vmem:[%s3 + $0x10] sm:$0xff]
        %v252 = vld [vmem:[%s3 + $0x18] sm:$0xff]
        %v253 = vld [vmem:[%s3 + $0x20] sm:$0xff]
        %v254 = vld [vmem:[%s3 + $0x28] sm:$0xff]
        %v255 = vld [vmem:[%s3 + $0x30] sm:$0xff]
        %v256 = vld [vmem:[%s3 + $0x38] sm:$0xff]
        %v257 = vld [vmem:[%s3 + $0x40] sm:$0xff]
        %v258 = vld [vmem:[%s3 + $0x48] sm:$0xff]
        %v259 = vld [vmem:[%s3 + $0x50] sm:$0xff]
        %v260 = vld [vmem:[%s3 + $0x58] sm:$0xff]
        %v261 = vld [vmem:[%s4] sm:$0xff]
        %v262 = vld [vmem:[%s4 + $0x8] sm:$0xff]
        %v263 = vld [vmem:[%s4 + $0x10] sm:$0xff]
        %v264 = vld [vmem:[%s4 + $0x18] sm:$0xff]
        %v265 = vld [vmem:[%s4 + $0x20] sm:$0xff]
        %v266 = vld [vmem:[%s4 + $0x28] sm:$0xff]
        %v267 = vld [vmem:[%s4 + $0x30] sm:$0xff]
        %v268 = vld [vmem:[%s4 + $0x38] sm:$0xff]
        %v269 = vld [vmem:[%s4 + $0x40] sm:$0xff]
        %v270 = vld [vmem:[%s4 + $0x48] sm:$0xff]
        %v271 = vld [vmem:[%s4 + $0x50] sm:$0xff]
        %v272 = vld [vmem:[%s4 + $0x58] sm:$0xff]
        %v273 = vld [vmem:[%s5] sm:$0xff]
        %v274 = vlaneseq
        %v275 = vand.u32 %v274, 127
        %v276 = vld [vmem:[%s246] sm:$0xf]
        %278 = vset.pattern.permute.xlu0 0
        %279 = vperm.xlu0 %278, %v248
        %v280 = vpop.permute.xlu0 %279
        %vm282 = vcmask 31744
        %v284 = vsel %vm282, %v247, 0
        %vm286 = vcmask 1043456
        %v288 = vsel %vm286, %v276, 0
        %290 = vmatprep.subr.mxu0 0.0
        %291 = vmatpush1.msra.mxu0 %v288
        %292 = vmatprep.subr.mxu0 0.0
        %293 = vmatpush1.msra.mxu0 0.0
        %294 = vmatprep.subr.mxu0 0.0
        %295 = vmatpush1.msra.mxu0 0.0
        %296 = vmatprep.subr.mxu0 0.0
        %297 = vmatpush1.msra.mxu0 0.0
        %298 = vmatprep.subr.mxu0 0.0
        %299 = vmatpush1.msra.mxu0 0.0
        %300 = vmatprep.subr.mxu0 0.0
        %301 = vmatpush1.msra.mxu0 0.0
        %302 = vmatprep.subr.mxu0 0.0
        %303 = vmatpush1.msra.mxu0 0.0
        %304 = vmatprep.subr.mxu0 0.0
        %305 = vmatpush1.msra.mxu0 0.0
        %306 = vmatprep.subr.mxu0 0.0
        %307 = vmatpush1.msra.mxu0 0.0
        %308 = vmatprep.subr.mxu0 0.0
        %309 = vmatpush1.msra.mxu0 0.0
        %310 = vmatprep.subr.mxu0 0.0
        %311 = vmatpush1.msra.mxu0 0.0
        %312 = vmatprep.subr.mxu0 0.0
        %313 = vmatpush1.msra.mxu0 0.0
        %314 = vmatprep.subr.mxu0 0.0
        %315 = vmatpush1.msra.mxu0 0.0
        %316 = vmatprep.subr.mxu0 0.0
        %317 = vmatpush1.msra.mxu0 0.0
        %318 = vmatprep.subr.mxu0 0.0
        %319 = vmatpush1.msra.mxu0 0.0
        %320 = vmatprep.subr.mxu0 0.0
        %321 = vmatpush1.msra.mxu0 0.0
        %322 = vmatprep.subr.mxu0 0.0
        %323 = vmatpush1.msra.mxu0 0.0
        %324 = vmatprep.subr.mxu0 0.0
        %325 = vmatpush1.msra.mxu0 0.0
        %326 = vmatprep.subr.mxu0 0.0
        %327 = vmatpush1.msra.mxu0 0.0
        %328 = vmatprep.subr.mxu0 0.0
        %329 = vmatpush1.msra.mxu0 0.0
        %330 = vmatprep.subr.mxu0 0.0
        %331 = vmatpush1.msra.mxu0 0.0
        %332 = vmatprep.subr.mxu0 0.0
        %333 = vmatpush1.msra.mxu0 0.0
        %334 = vmatprep.subr.mxu0 0.0
        %335 = vmatpush1.msra.mxu0 0.0
        %336 = vmatprep.subr.mxu0 0.0
        %337 = vmatpush1.msra.mxu0 0.0
        %338 = vmatprep.subr.mxu0 0.0
        %339 = vmatpush1.msra.mxu0 0.0
        %340 = vmatprep.subr.mxu0 0.0
        %341 = vmatpush1.msra.mxu0 0.0
        %342 = vmatprep.subr.mxu0 0.0
        %343 = vmatpush1.msra.mxu0 0.0
        %344 = vmatprep.subr.mxu0 0.0
        %345 = vmatpush1.msra.mxu0 0.0
        %346 = vmatprep.subr.mxu0 0.0
        %347 = vmatpush1.msra.mxu0 0.0
        %348 = vmatprep.subr.mxu0 0.0
        %349 = vmatpush1.msra.mxu0 0.0
        %350 = vmatprep.subr.mxu0 0.0
        %351 = vmatpush1.msra.mxu0 0.0
        %352 = vmatprep.subr.mxu0 0.0
        %353 = vmatpush1.msra.mxu0 0.0
        %354 = vmatprep.mubr.f32.mxu0 0.0
        %355 = vmatmul.mubr.f32.gmra.mrb[0].mxu0 %v284
        %v356 = vpop.f32.mrb[0].mxu0
        %v357 = vadd.f32 %v280, %v356
        %v358 = vpop.f32.mrb[0].mxu0
        %359 = vdwg.mxu0
        %v360 = vmax.f32 %v276, 0.0
        %361 = vrot.lane.b32.xlu0 %v360, 1
        %v362 = vpop.permute.xlu0 %361
        %vm363 = vcmp.ge.s32.totalorder %v275, 1
        %v364 = vsel %vm363, 1, 0
        %vm365 = vcmp.eq.s32.totalorder %v364, 1
        %v366 = vsel %vm365, %v362, 0.0
        %v368 = vsel %vm282, %v249, 0
        %v371 = vsel %vm282, %v250, 0
        %v374 = vsel %vm282, %v251, 0
        %v377 = vsel %vm282, %v252, 0
        %v380 = vsel %vm286, %v366, 0
        %382 = vmatprep.subr.mxu0 0.0
        %383 = vmatpush1.msra.mxu0 %v380
        %384 = vmatprep.subr.mxu0 0.0
        %385 = vmatpush1.msra.mxu0 0.0
        %386 = vmatprep.subr.mxu0 0.0
        %387 = vmatpush1.msra.mxu0 0.0
        %388 = vmatprep.subr.mxu0 0.0
        %389 = vmatpush1.msra.mxu0 0.0
        %390 = vmatprep.subr.mxu0 0.0
        %391 = vmatpush1.msra.mxu0 0.0
        %392 = vmatprep.subr.mxu0 0.0
        %393 = vmatpush1.msra.mxu0 0.0
        %394 = vmatprep.subr.mxu0 0.0
        %395 = vmatpush1.msra.mxu0 0.0
        %396 = vmatprep.subr.mxu0 0.0
        %397 = vmatpush1.msra.mxu0 0.0
        %398 = vmatprep.subr.mxu0 0.0
        %399 = vmatpush1.msra.mxu0 0.0
        %400 = vmatprep.subr.mxu0 0.0
        %401 = vmatpush1.msra.mxu0 0.0
        %402 = vmatprep.subr.mxu0 0.0
        %403 = vmatpush1.msra.mxu0 0.0
        %404 = vmatprep.subr.mxu0 0.0
        %405 = vmatpush1.msra.mxu0 0.0
        %406 = vmatprep.subr.mxu0 0.0
        %407 = vmatpush1.msra.mxu0 0.0
        %408 = vmatprep.subr.mxu0 0.0
        %409 = vmatpush1.msra.mxu0 0.0
        %410 = vmatprep.subr.mxu0 0.0
        %411 = vmatpush1.msra.mxu0 0.0
        %412 = vmatprep.subr.mxu0 0.0
        %413 = vmatpush1.msra.mxu0 0.0
        %414 = vmatprep.subr.mxu0 0.0
        %415 = vmatpush1.msra.mxu0 0.0
        %416 = vmatprep.subr.mxu0 0.0
        %417 = vmatpush1.msra.mxu0 0.0
        %418 = vmatprep.subr.mxu0 0.0
        %419 = vmatpush1.msra.mxu0 0.0
        %420 = vmatprep.subr.mxu0 0.0
        %421 = vmatpush1.msra.mxu0 0.0
        %422 = vmatprep.subr.mxu0 0.0
        %423 = vmatpush1.msra.mxu0 0.0
        %424 = vmatprep.subr.mxu0 0.0
        %425 = vmatpush1.msra.mxu0 0.0
        %426 = vmatprep.subr.mxu0 0.0
        %427 = vmatpush1.msra.mxu0 0.0
        %428 = vmatprep.subr.mxu0 0.0
        %429 = vmatpush1.msra.mxu0 0.0
        %430 = vmatprep.subr.mxu0 0.0
        %431 = vmatpush1.msra.mxu0 0.0
        %432 = vmatprep.subr.mxu0 0.0
        %433 = vmatpush1.msra.mxu0 0.0
        %434 = vmatprep.subr.mxu0 0.0
        %435 = vmatpush1.msra.mxu0 0.0
        %436 = vmatprep.subr.mxu0 0.0
        %437 = vmatpush1.msra.mxu0 0.0
        %438 = vmatprep.subr.mxu0 0.0
        %439 = vmatpush1.msra.mxu0 0.0
        %440 = vmatprep.subr.mxu0 0.0
        %441 = vmatpush1.msra.mxu0 0.0
        %442 = vmatprep.subr.mxu0 0.0
        %443 = vmatpush1.msra.mxu0 0.0
        %444 = vmatprep.subr.mxu0 0.0
        %445 = vmatpush1.msra.mxu0 0.0
        %446 = vmatprep.mubr.f32.mxu0 0.0
        %447 = vmatmul.mubr.f32.gmra.mrb[0].mxu0 %v368
        %v448 = vpop.f32.mrb[0].mxu0
        %v449 = vadd.f32 0.0, %v448
        %v450 = vpop.f32.mrb[0].mxu0
        %451 = vmatprep.mubr.f32.mxu0 0.0
        %452 = vmatmul.mubr.f32.gmra.mrb[0].mxu0 %v371
        %v453 = vpop.f32.mrb[0].mxu0
        %v454 = vadd.f32 0.0, %v453
        %v455 = vpop.f32.mrb[0].mxu0
        %456 = vmatprep.mubr.f32.mxu0 0.0
        %457 = vmatmul.mubr.f32.gmra.mrb[0].mxu0 %v374
        %v458 = vpop.f32.mrb[0].mxu0
        %v459 = vadd.f32 0.0, %v458
        %v460 = vpop.f32.mrb[0].mxu0
        %461 = vmatprep.mubr.f32.mxu0 0.0
        %462 = vmatmul.mubr.f32.gmra.mrb[0].mxu0 %v377
        %v463 = vpop.f32.mrb[0].mxu0
        %v464 = vadd.f32 0.0, %v463
        %v465 = vpop.f32.mrb[0].mxu0
        %466 = vdwg.mxu0
        %v468 = vsel %vm282, %v253, 0
        %v471 = vsel %vm282, %v254, 0
        %v474 = vsel %vm282, %v255, 0
        %v477 = vsel %vm282, %v256, 0
        %v480 = vsel %vm286, %v360, 0
        %482 = vmatprep.subr.mxu0 0.0
        %483 = vmatpush1.msra.mxu0 %v480
        %484 = vmatprep.subr.mxu0 0.0
        %485 = vmatpush1.msra.mxu0 0.0
        %486 = vmatprep.subr.mxu0 0.0
        %487 = vmatpush1.msra.mxu0 0.0
        %488 = vmatprep.subr.mxu0 0.0
        %489 = vmatpush1.msra.mxu0 0.0
        %490 = vmatprep.subr.mxu0 0.0
        %491 = vmatpush1.msra.mxu0 0.0
        %492 = vmatprep.subr.mxu0 0.0
        %493 = vmatpush1.msra.mxu0 0.0
        %494 = vmatprep.subr.mxu0 0.0
        %495 = vmatpush1.msra.mxu0 0.0
        %496 = vmatprep.subr.mxu0 0.0
        %497 = vmatpush1.msra.mxu0 0.0
        %498 = vmatprep.subr.mxu0 0.0
        %499 = vmatpush1.msra.mxu0 0.0
        %500 = vmatprep.subr.mxu0 0.0
        %501 = vmatpush1.msra.mxu0 0.0
        %502 = vmatprep.subr.mxu0 0.0
        %503 = vmatpush1.msra.mxu0 0.0
        %504 = vmatprep.subr.mxu0 0.0
        %505 = vmatpush1.msra.mxu0 0.0
        %506 = vmatprep.subr.mxu0 0.0
        %507 = vmatpush1.msra.mxu0 0.0
        %508 = vmatprep.subr.mxu0 0.0
        %509 = vmatpush1.msra.mxu0 0.0
        %510 = vmatprep.subr.mxu0 0.0
        %511 = vmatpush1.msra.mxu0 0.0
        %512 = vmatprep.subr.mxu0 0.0
        %513 = vmatpush1.msra.mxu0 0.0
        %514 = vmatprep.subr.mxu0 0.0
        %515 = vmatpush1.msra.mxu0 0.0
        %516 = vmatprep.subr.mxu0 0.0
        %517 = vmatpush1.msra.mxu0 0.0
        %518 = vmatprep.subr.mxu0 0.0
        %519 = vmatpush1.msra.mxu0 0.0
        %520 = vmatprep.subr.mxu0 0.0
        %521 = vmatpush1.msra.mxu0 0.0
        %522 = vmatprep.subr.mxu0 0.0
        %523 = vmatpush1.msra.mxu0 0.0
        %524 = vmatprep.subr.mxu0 0.0
        %525 = vmatpush1.msra.mxu0 0.0
        %526 = vmatprep.subr.mxu0 0.0
        %527 = vmatpush1.msra.mxu0 0.0
        %528 = vmatprep.subr.mxu0 0.0
        %529 = vmatpush1.msra.mxu0 0.0
        %530 = vmatprep.subr.mxu0 0.0
        %531 = vmatpush1.msra.mxu0 0.0
        %532 = vmatprep.subr.mxu0 0.0
        %533 = vmatpush1.msra.mxu0 0.0
        %534 = vmatprep.subr.mxu0 0.0
        %535 = vmatpush1.msra.mxu0 0.0
        %536 = vmatprep.subr.mxu0 0.0
        %537 = vmatpush1.msra.mxu0 0.0
        %538 = vmatprep.subr.mxu0 0.0
        %539 = vmatpush1.msra.mxu0 0.0
        %540 = vmatprep.subr.mxu0 0.0
        %541 = vmatpush1.msra.mxu0 0.0
        %542 = vmatprep.subr.mxu0 0.0
        %543 = vmatpush1.msra.mxu0 0.0
        %544 = vmatprep.subr.mxu0 0.0
        %545 = vmatpush1.msra.mxu0 0.0
        %546 = vmatprep.mubr.f32.mxu0 0.0
        %547 = vmatmul.mubr.f32.gmra.mrb[0].mxu0 %v468
        %v548 = vpop.f32.mrb[0].mxu0
        %v549 = vadd.f32 %v449, %v548
        %v550 = vpop.f32.mrb[0].mxu0
        %551 = vmatprep.mubr.f32.mxu0 0.0
        %552 = vmatmul.mubr.f32.gmra.mrb[0].mxu0 %v471
        %v553 = vpop.f32.mrb[0].mxu0
        %v554 = vadd.f32 %v454, %v553
        %v555 = vpop.f32.mrb[0].mxu0
        %556 = vmatprep.mubr.f32.mxu0 0.0
        %557 = vmatmul.mubr.f32.gmra.mrb[0].mxu0 %v474
        %v558 = vpop.f32.mrb[0].mxu0
        %v559 = vadd.f32 %v459, %v558
        %v560 = vpop.f32.mrb[0].mxu0
        %561 = vmatprep.mubr.f32.mxu0 0.0
        %562 = vmatmul.mubr.f32.gmra.mrb[0].mxu0 %v477
        %v563 = vpop.f32.mrb[0].mxu0
        %v564 = vadd.f32 %v464, %v563
        %v565 = vpop.f32.mrb[0].mxu0
        %566 = vdwg.mxu0
        %567 = vrot.lane.b32.xlu0 %v360, 127
        %v568 = vpop.permute.xlu0 %567
        %vm569 = vcmp.lt.s32.totalorder %v275, 127
        %v570 = vsel %vm569, 1, 0
        %vm571 = vcmp.eq.s32.totalorder %v570, 1
        %v572 = vsel %vm571, %v568, 0.0
        %v574 = vsel %vm282, %v257, 0
        %v577 = vsel %vm282, %v258, 0
        %v580 = vsel %vm282, %v259, 0
        %v583 = vsel %vm282, %v260, 0
        %v586 = vsel %vm286, %v572, 0
        %588 = vmatprep.subr.mxu0 0.0
        %589 = vmatpush1.msra.mxu0 %v586
        %590 = vmatprep.subr.mxu0 0.0
        %591 = vmatpush1.msra.mxu0 0.0
        %592 = vmatprep.subr.mxu0 0.0
        %593 = vmatpush1.msra.mxu0 0.0
        %594 = vmatprep.subr.mxu0 0.0
        %595 = vmatpush1.msra.mxu0 0.0
        %596 = vmatprep.subr.mxu0 0.0
        %597 = vmatpush1.msra.mxu0 0.0
        %598 = vmatprep.subr.mxu0 0.0
        %599 = vmatpush1.msra.mxu0 0.0
        %600 = vmatprep.subr.mxu0 0.0
        %601 = vmatpush1.msra.mxu0 0.0
        %602 = vmatprep.subr.mxu0 0.0
        %603 = vmatpush1.msra.mxu0 0.0
        %604 = vmatprep.subr.mxu0 0.0
        %605 = vmatpush1.msra.mxu0 0.0
        %606 = vmatprep.subr.mxu0 0.0
        %607 = vmatpush1.msra.mxu0 0.0
        %608 = vmatprep.subr.mxu0 0.0
        %609 = vmatpush1.msra.mxu0 0.0
        %610 = vmatprep.subr.mxu0 0.0
        %611 = vmatpush1.msra.mxu0 0.0
        %612 = vmatprep.subr.mxu0 0.0
        %613 = vmatpush1.msra.mxu0 0.0
        %614 = vmatprep.subr.mxu0 0.0
        %615 = vmatpush1.msra.mxu0 0.0
        %616 = vmatprep.subr.mxu0 0.0
        %617 = vmatpush1.msra.mxu0 0.0
        %618 = vmatprep.subr.mxu0 0.0
        %619 = vmatpush1.msra.mxu0 0.0
        %620 = vmatprep.subr.mxu0 0.0
        %621 = vmatpush1.msra.mxu0 0.0
        %622 = vmatprep.subr.mxu0 0.0
        %623 = vmatpush1.msra.mxu0 0.0
        %624 = vmatprep.subr.mxu0 0.0
        %625 = vmatpush1.msra.mxu0 0.0
        %626 = vmatprep.subr.mxu0 0.0
        %627 = vmatpush1.msra.mxu0 0.0
        %628 = vmatprep.subr.mxu0 0.0
        %629 = vmatpush1.msra.mxu0 0.0
        %630 = vmatprep.subr.mxu0 0.0
        %631 = vmatpush1.msra.mxu0 0.0
        %632 = vmatprep.subr.mxu0 0.0
        %633 = vmatpush1.msra.mxu0 0.0
        %634 = vmatprep.subr.mxu0 0.0
        %635 = vmatpush1.msra.mxu0 0.0
        %636 = vmatprep.subr.mxu0 0.0
        %637 = vmatpush1.msra.mxu0 0.0
        %638 = vmatprep.subr.mxu0 0.0
        %639 = vmatpush1.msra.mxu0 0.0
        %640 = vmatprep.subr.mxu0 0.0
        %641 = vmatpush1.msra.mxu0 0.0
        %642 = vmatprep.subr.mxu0 0.0
        %643 = vmatpush1.msra.mxu0 0.0
        %644 = vmatprep.subr.mxu0 0.0
        %645 = vmatpush1.msra.mxu0 0.0
        %646 = vmatprep.subr.mxu0 0.0
        %647 = vmatpush1.msra.mxu0 0.0
        %648 = vmatprep.subr.mxu0 0.0
        %649 = vmatpush1.msra.mxu0 0.0
        %650 = vmatprep.subr.mxu0 0.0
        %651 = vmatpush1.msra.mxu0 0.0
        %652 = vmatprep.mubr.f32.mxu0 0.0
        %653 = vmatmul.mubr.f32.gmra.mrb[0].mxu0 %v574
        %v654 = vpop.f32.mrb[0].mxu0
        %v655 = vadd.f32 0.0, %v654
        %v656 = vpop.f32.mrb[0].mxu0
        %657 = vmatprep.mubr.f32.mxu0 0.0
        %658 = vmatmul.mubr.f32.gmra.mrb[0].mxu0 %v577
        %v659 = vpop.f32.mrb[0].mxu0
        %v660 = vadd.f32 0.0, %v659
        %v661 = vpop.f32.mrb[0].mxu0
        %662 = vmatprep.mubr.f32.mxu0 0.0
        %663 = vmatmul.mubr.f32.gmra.mrb[0].mxu0 %v580
        %v664 = vpop.f32.mrb[0].mxu0
        %v665 = vadd.f32 0.0, %v664
        %v666 = vpop.f32.mrb[0].mxu0
        %667 = vmatprep.mubr.f32.mxu0 0.0
        %668 = vmatmul.mubr.f32.gmra.mrb[0].mxu0 %v583
        %v669 = vpop.f32.mrb[0].mxu0
        %v670 = vadd.f32 0.0, %v669
        %v671 = vpop.f32.mrb[0].mxu0
        %672 = vdwg.mxu0
        %v673 = vadd.f32 %v549, %v655
        %v674 = vadd.f32 %v554, %v660
        %v675 = vadd.f32 %v559, %v665
        %v676 = vadd.f32 %v564, %v670
        %v677 = vmax.f32 %v673, 0.0
        %v678 = vmax.f32 %v674, 0.0
        %v679 = vmax.f32 %v675, 0.0
        %v680 = vmax.f32 %v676, 0.0
        %681 = vrot.lane.b32.xlu0 %v677, 1
        %v682 = vpop.permute.xlu0 %681
        %683 = vrot.lane.b32.xlu0 %v678, 1
        %v684 = vpop.permute.xlu0 %683
        %685 = vrot.lane.b32.xlu0 %v679, 1
        %v686 = vpop.permute.xlu0 %685
        %687 = vrot.lane.b32.xlu0 %v680, 1
        %v688 = vpop.permute.xlu0 %687
        %v689 = vsel %vm365, %v682, 0.0
        %v690 = vsel %vm365, %v684, 0.0
        %v691 = vsel %vm365, %v686, 0.0
        %v692 = vsel %vm365, %v688, 0.0
        %vm693 = vcmask 261120
        %v695 = vsel %vm693, %v261, 0
        %v698 = vsel %vm693, %v262, 0
        %v701 = vsel %vm693, %v263, 0
        %v704 = vsel %vm693, %v264, 0
        %706 = vmatprep.subr.mxu0 0.0
        %707 = vmatpush1.msra.mxu0 %v689
        %708 = vmatprep.subr.mxu0 0.0
        %709 = vmatpush1.msra.mxu0 %v690
        %710 = vmatprep.subr.mxu0 0.0
        %711 = vmatpush1.msra.mxu0 %v691
        %712 = vmatprep.subr.mxu0 0.0
        %713 = vmatpush1.msra.mxu0 %v692
        %714 = vmatprep.subr.mxu0 0.0
        %715 = vmatpush1.msra.mxu0 0.0
        %716 = vmatprep.subr.mxu0 0.0
        %717 = vmatpush1.msra.mxu0 0.0
        %718 = vmatprep.subr.mxu0 0.0
        %719 = vmatpush1.msra.mxu0 0.0
        %720 = vmatprep.subr.mxu0 0.0
        %721 = vmatpush1.msra.mxu0 0.0
        %722 = vmatprep.subr.mxu0 0.0
        %723 = vmatpush1.msra.mxu0 0.0
        %724 = vmatprep.subr.mxu0 0.0
        %725 = vmatpush1.msra.mxu0 0.0
        %726 = vmatprep.subr.mxu0 0.0
        %727 = vmatpush1.msra.mxu0 0.0
        %728 = vmatprep.subr.mxu0 0.0
        %729 = vmatpush1.msra.mxu0 0.0
        %730 = vmatprep.subr.mxu0 0.0
        %731 = vmatpush1.msra.mxu0 0.0
        %732 = vmatprep.subr.mxu0 0.0
        %733 = vmatpush1.msra.mxu0 0.0
        %734 = vmatprep.subr.mxu0 0.0
        %735 = vmatpush1.msra.mxu0 0.0
        %736 = vmatprep.subr.mxu0 0.0
        %737 = vmatpush1.msra.mxu0 0.0
        %738 = vmatprep.subr.mxu0 0.0
        %739 = vmatpush1.msra.mxu0 0.0
        %740 = vmatprep.subr.mxu0 0.0
        %741 = vmatpush1.msra.mxu0 0.0
        %742 = vmatprep.subr.mxu0 0.0
        %743 = vmatpush1.msra.mxu0 0.0
        %744 = vmatprep.subr.mxu0 0.0
        %745 = vmatpush1.msra.mxu0 0.0
        %746 = vmatprep.subr.mxu0 0.0
        %747 = vmatpush1.msra.mxu0 0.0
        %748 = vmatprep.subr.mxu0 0.0
        %749 = vmatpush1.msra.mxu0 0.0
        %750 = vmatprep.subr.mxu0 0.0
        %751 = vmatpush1.msra.mxu0 0.0
        %752 = vmatprep.subr.mxu0 0.0
        %753 = vmatpush1.msra.mxu0 0.0
        %754 = vmatprep.subr.mxu0 0.0
        %755 = vmatpush1.msra.mxu0 0.0
        %756 = vmatprep.subr.mxu0 0.0
        %757 = vmatpush1.msra.mxu0 0.0
        %758 = vmatprep.subr.mxu0 0.0
        %759 = vmatpush1.msra.mxu0 0.0
        %760 = vmatprep.subr.mxu0 0.0
        %761 = vmatpush1.msra.mxu0 0.0
        %762 = vmatprep.subr.mxu0 0.0
        %763 = vmatpush1.msra.mxu0 0.0
        %764 = vmatprep.subr.mxu0 0.0
        %765 = vmatpush1.msra.mxu0 0.0
        %766 = vmatprep.subr.mxu0 0.0
        %767 = vmatpush1.msra.mxu0 0.0
        %768 = vmatprep.subr.mxu0 0.0
        %769 = vmatpush1.msra.mxu0 0.0
        %770 = vmatprep.mubr.f32.mxu0 0.0
        %771 = vmatmul.mubr.f32.gmra.mrb[0].mxu0 %v695
        %v772 = vpop.f32.mrb[0].mxu0
        %v773 = vadd.f32 0.0, %v772
        %v774 = vpop.f32.mrb[0].mxu0
        %775 = vmatprep.mubr.f32.mxu0 0.0
        %776 = vmatmul.mubr.f32.gmra.mrb[0].mxu0 %v698
        %v777 = vpop.f32.mrb[0].mxu0
        %v778 = vadd.f32 0.0, %v777
        %v779 = vpop.f32.mrb[0].mxu0
        %780 = vmatprep.mubr.f32.mxu0 0.0
        %781 = vmatmul.mubr.f32.gmra.mrb[0].mxu0 %v701
        %v782 = vpop.f32.mrb[0].mxu0
        %v783 = vadd.f32 0.0, %v782
        %v784 = vpop.f32.mrb[0].mxu0
        %785 = vmatprep.mubr.f32.mxu0 0.0
        %786 = vmatmul.mubr.f32.gmra.mrb[0].mxu0 %v704
        %v787 = vpop.f32.mrb[0].mxu0
        %v788 = vadd.f32 0.0, %v787
        %v789 = vpop.f32.mrb[0].mxu0
        %790 = vdwg.mxu0
        %v792 = vsel %vm693, %v265, 0
        %v795 = vsel %vm693, %v266, 0
        %v798 = vsel %vm693, %v267, 0
        %v801 = vsel %vm693, %v268, 0
        %803 = vmatprep.subr.mxu0 0.0
        %804 = vmatpush1.msra.mxu0 %v677
        %805 = vmatprep.subr.mxu0 0.0
        %806 = vmatpush1.msra.mxu0 %v678
        %807 = vmatprep.subr.mxu0 0.0
        %808 = vmatpush1.msra.mxu0 %v679
        %809 = vmatprep.subr.mxu0 0.0
        %810 = vmatpush1.msra.mxu0 %v680
        %811 = vmatprep.subr.mxu0 0.0
        %812 = vmatpush1.msra.mxu0 0.0
        %813 = vmatprep.subr.mxu0 0.0
        %814 = vmatpush1.msra.mxu0 0.0
        %815 = vmatprep.subr.mxu0 0.0
        %816 = vmatpush1.msra.mxu0 0.0
        %817 = vmatprep.subr.mxu0 0.0
        %818 = vmatpush1.msra.mxu0 0.0
        %819 = vmatprep.subr.mxu0 0.0
        %820 = vmatpush1.msra.mxu0 0.0
        %821 = vmatprep.subr.mxu0 0.0
        %822 = vmatpush1.msra.mxu0 0.0
        %823 = vmatprep.subr.mxu0 0.0
        %824 = vmatpush1.msra.mxu0 0.0
        %825 = vmatprep.subr.mxu0 0.0
        %826 = vmatpush1.msra.mxu0 0.0
        %827 = vmatprep.subr.mxu0 0.0
        %828 = vmatpush1.msra.mxu0 0.0
        %829 = vmatprep.subr.mxu0 0.0
        %830 = vmatpush1.msra.mxu0 0.0
        %831 = vmatprep.subr.mxu0 0.0
        %832 = vmatpush1.msra.mxu0 0.0
        %833 = vmatprep.subr.mxu0 0.0
        %834 = vmatpush1.msra.mxu0 0.0
        %835 = vmatprep.subr.mxu0 0.0
        %836 = vmatpush1.msra.mxu0 0.0
        %837 = vmatprep.subr.mxu0 0.0
        %838 = vmatpush1.msra.mxu0 0.0
        %839 = vmatprep.subr.mxu0 0.0
        %840 = vmatpush1.msra.mxu0 0.0
        %841 = vmatprep.subr.mxu0 0.0
        %842 = vmatpush1.msra.mxu0 0.0
        %843 = vmatprep.subr.mxu0 0.0
        %844 = vmatpush1.msra.mxu0 0.0
        %845 = vmatprep.subr.mxu0 0.0
        %846 = vmatpush1.msra.mxu0 0.0
        %847 = vmatprep.subr.mxu0 0.0
        %848 = vmatpush1.msra.mxu0 0.0
        %849 = vmatprep.subr.mxu0 0.0
        %850 = vmatpush1.msra.mxu0 0.0
        %851 = vmatprep.subr.mxu0 0.0
        %852 = vmatpush1.msra.mxu0 0.0
        %853 = vmatprep.subr.mxu0 0.0
        %854 = vmatpush1.msra.mxu0 0.0
        %855 = vmatprep.subr.mxu0 0.0
        %856 = vmatpush1.msra.mxu0 0.0
        %857 = vmatprep.subr.mxu0 0.0
        %858 = vmatpush1.msra.mxu0 0.0
        %859 = vmatprep.subr.mxu0 0.0
        %860 = vmatpush1.msra.mxu0 0.0
        %861 = vmatprep.subr.mxu0 0.0
        %862 = vmatpush1.msra.mxu0 0.0
        %863 = vmatprep.subr.mxu0 0.0
        %864 = vmatpush1.msra.mxu0 0.0
        %865 = vmatprep.subr.mxu0 0.0
        %866 = vmatpush1.msra.mxu0 0.0
        %867 = vmatprep.mubr.f32.mxu0 0.0
        %868 = vmatmul.mubr.f32.gmra.mrb[0].mxu0 %v792
        %v869 = vpop.f32.mrb[0].mxu0
        %v870 = vadd.f32 %v773, %v869
        %v871 = vpop.f32.mrb[0].mxu0
        %872 = vmatprep.mubr.f32.mxu0 0.0
        %873 = vmatmul.mubr.f32.gmra.mrb[0].mxu0 %v795
        %v874 = vpop.f32.mrb[0].mxu0
        %v875 = vadd.f32 %v778, %v874
        %v876 = vpop.f32.mrb[0].mxu0
        %877 = vmatprep.mubr.f32.mxu0 0.0
        %878 = vmatmul.mubr.f32.gmra.mrb[0].mxu0 %v798
        %v879 = vpop.f32.mrb[0].mxu0
        %v880 = vadd.f32 %v783, %v879
        %v881 = vpop.f32.mrb[0].mxu0
        %882 = vmatprep.mubr.f32.mxu0 0.0
        %883 = vmatmul.mubr.f32.gmra.mrb[0].mxu0 %v801
        %v884 = vpop.f32.mrb[0].mxu0
        %v885 = vadd.f32 %v788, %v884
        %v886 = vpop.f32.mrb[0].mxu0
        %887 = vdwg.mxu0
        %888 = vrot.lane.b32.xlu0 %v677, 127
        %v889 = vpop.permute.xlu0 %888
        %890 = vrot.lane.b32.xlu0 %v678, 127
        %v891 = vpop.permute.xlu0 %890
        %892 = vrot.lane.b32.xlu0 %v679, 127
        %v893 = vpop.permute.xlu0 %892
        %894 = vrot.lane.b32.xlu0 %v680, 127
        %v895 = vpop.permute.xlu0 %894
        %v896 = vsel %vm571, %v889, 0.0
        %v897 = vsel %vm571, %v891, 0.0
        %v898 = vsel %vm571, %v893, 0.0
        %v899 = vsel %vm571, %v895, 0.0
        %v901 = vsel %vm693, %v269, 0
        %v904 = vsel %vm693, %v270, 0
        %v907 = vsel %vm693, %v271, 0
        %v910 = vsel %vm693, %v272, 0
        %912 = vmatprep.subr.mxu0 0.0
        %913 = vmatpush1.msra.mxu0 %v896
        %914 = vmatprep.subr.mxu0 0.0
        %915 = vmatpush1.msra.mxu0 %v897
        %916 = vmatprep.subr.mxu0 0.0
        %917 = vmatpush1.msra.mxu0 %v898
        %918 = vmatprep.subr.mxu0 0.0
        %919 = vmatpush1.msra.mxu0 %v899
        %920 = vmatprep.subr.mxu0 0.0
        %921 = vmatpush1.msra.mxu0 0.0
        %922 = vmatprep.subr.mxu0 0.0
        %923 = vmatpush1.msra.mxu0 0.0
        %924 = vmatprep.subr.mxu0 0.0
        %925 = vmatpush1.msra.mxu0 0.0
        %926 = vmatprep.subr.mxu0 0.0
        %927 = vmatpush1.msra.mxu0 0.0
        %928 = vmatprep.subr.mxu0 0.0
        %929 = vmatpush1.msra.mxu0 0.0
        %930 = vmatprep.subr.mxu0 0.0
        %931 = vmatpush1.msra.mxu0 0.0
        %932 = vmatprep.subr.mxu0 0.0
        %933 = vmatpush1.msra.mxu0 0.0
        %934 = vmatprep.subr.mxu0 0.0
        %935 = vmatpush1.msra.mxu0 0.0
        %936 = vmatprep.subr.mxu0 0.0
        %937 = vmatpush1.msra.mxu0 0.0
        %938 = vmatprep.subr.mxu0 0.0
        %939 = vmatpush1.msra.mxu0 0.0
        %940 = vmatprep.subr.mxu0 0.0
        %941 = vmatpush1.msra.mxu0 0.0
        %942 = vmatprep.subr.mxu0 0.0
        %943 = vmatpush1.msra.mxu0 0.0
        %944 = vmatprep.subr.mxu0 0.0
        %945 = vmatpush1.msra.mxu0 0.0
        %946 = vmatprep.subr.mxu0 0.0
        %947 = vmatpush1.msra.mxu0 0.0
        %948 = vmatprep.subr.mxu0 0.0
        %949 = vmatpush1.msra.mxu0 0.0
        %950 = vmatprep.subr.mxu0 0.0
        %951 = vmatpush1.msra.mxu0 0.0
        %952 = vmatprep.subr.mxu0 0.0
        %953 = vmatpush1.msra.mxu0 0.0
        %954 = vmatprep.subr.mxu0 0.0
        %955 = vmatpush1.msra.mxu0 0.0
        %956 = vmatprep.subr.mxu0 0.0
        %957 = vmatpush1.msra.mxu0 0.0
        %958 = vmatprep.subr.mxu0 0.0
        %959 = vmatpush1.msra.mxu0 0.0
        %960 = vmatprep.subr.mxu0 0.0
        %961 = vmatpush1.msra.mxu0 0.0
        %962 = vmatprep.subr.mxu0 0.0
        %963 = vmatpush1.msra.mxu0 0.0
        %964 = vmatprep.subr.mxu0 0.0
        %965 = vmatpush1.msra.mxu0 0.0
        %966 = vmatprep.subr.mxu0 0.0
        %967 = vmatpush1.msra.mxu0 0.0
        %968 = vmatprep.subr.mxu0 0.0
        %969 = vmatpush1.msra.mxu0 0.0
        %970 = vmatprep.subr.mxu0 0.0
        %971 = vmatpush1.msra.mxu0 0.0
        %972 = vmatprep.subr.mxu0 0.0
        %973 = vmatpush1.msra.mxu0 0.0
        %974 = vmatprep.subr.mxu0 0.0
        %975 = vmatpush1.msra.mxu0 0.0
        %976 = vmatprep.mubr.f32.mxu0 0.0
        %977 = vmatmul.mubr.f32.gmra.mrb[0].mxu0 %v901
        %v978 = vpop.f32.mrb[0].mxu0
        %v979 = vadd.f32 0.0, %v978
        %v980 = vpop.f32.mrb[0].mxu0
        %981 = vmatprep.mubr.f32.mxu0 0.0
        %982 = vmatmul.mubr.f32.gmra.mrb[0].mxu0 %v904
        %v983 = vpop.f32.mrb[0].mxu0
        %v984 = vadd.f32 0.0, %v983
        %v985 = vpop.f32.mrb[0].mxu0
        %986 = vmatprep.mubr.f32.mxu0 0.0
        %987 = vmatmul.mubr.f32.gmra.mrb[0].mxu0 %v907
        %v988 = vpop.f32.mrb[0].mxu0
        %v989 = vadd.f32 0.0, %v988
        %v990 = vpop.f32.mrb[0].mxu0
        %991 = vmatprep.mubr.f32.mxu0 0.0
        %992 = vmatmul.mubr.f32.gmra.mrb[0].mxu0 %v910
        %v993 = vpop.f32.mrb[0].mxu0
        %v994 = vadd.f32 0.0, %v993
        %v995 = vpop.f32.mrb[0].mxu0
        %996 = vdwg.mxu0
        %v997 = vadd.f32 %v870, %v979
        %v998 = vadd.f32 %v875, %v984
        %v999 = vadd.f32 %v880, %v989
        %v1000 = vadd.f32 %v885, %v994
        %v1001 = vmax.f32 %v997, 0.0
        %v1002 = vmax.f32 %v998, 0.0
        %v1003 = vmax.f32 %v999, 0.0
        %v1004 = vmax.f32 %v1000, 0.0
        %v1006 = vsel %vm693, %v273, 0
        %1008 = vmatprep.subr.mxu0 0.0
        %1009 = vmatpush1.msra.mxu0 %v1001
        %1010 = vmatprep.subr.mxu0 0.0
        %1011 = vmatpush1.msra.mxu0 %v1002
        %1012 = vmatprep.subr.mxu0 0.0
        %1013 = vmatpush1.msra.mxu0 %v1003
        %1014 = vmatprep.subr.mxu0 0.0
        %1015 = vmatpush1.msra.mxu0 %v1004
        %1016 = vmatprep.subr.mxu0 0.0
        %1017 = vmatpush1.msra.mxu0 0.0
        %1018 = vmatprep.subr.mxu0 0.0
        %1019 = vmatpush1.msra.mxu0 0.0
        %1020 = vmatprep.subr.mxu0 0.0
        %1021 = vmatpush1.msra.mxu0 0.0
        %1022 = vmatprep.subr.mxu0 0.0
        %1023 = vmatpush1.msra.mxu0 0.0
        %1024 = vmatprep.subr.mxu0 0.0
        %1025 = vmatpush1.msra.mxu0 0.0
        %1026 = vmatprep.subr.mxu0 0.0
        %1027 = vmatpush1.msra.mxu0 0.0
        %1028 = vmatprep.subr.mxu0 0.0
        %1029 = vmatpush1.msra.mxu0 0.0
        %1030 = vmatprep.subr.mxu0 0.0
        %1031 = vmatpush1.msra.mxu0 0.0
        %1032 = vmatprep.subr.mxu0 0.0
        %1033 = vmatpush1.msra.mxu0 0.0
        %1034 = vmatprep.subr.mxu0 0.0
        %1035 = vmatpush1.msra.mxu0 0.0
        %1036 = vmatprep.subr.mxu0 0.0
        %1037 = vmatpush1.msra.mxu0 0.0
        %1038 = vmatprep.subr.mxu0 0.0
        %1039 = vmatpush1.msra.mxu0 0.0
        %1040 = vmatprep.subr.mxu0 0.0
        %1041 = vmatpush1.msra.mxu0 0.0
        %1042 = vmatprep.subr.mxu0 0.0
        %1043 = vmatpush1.msra.mxu0 0.0
        %1044 = vmatprep.subr.mxu0 0.0
        %1045 = vmatpush1.msra.mxu0 0.0
        %1046 = vmatprep.subr.mxu0 0.0
        %1047 = vmatpush1.msra.mxu0 0.0
        %1048 = vmatprep.subr.mxu0 0.0
        %1049 = vmatpush1.msra.mxu0 0.0
        %1050 = vmatprep.subr.mxu0 0.0
        %1051 = vmatpush1.msra.mxu0 0.0
        %1052 = vmatprep.subr.mxu0 0.0
        %1053 = vmatpush1.msra.mxu0 0.0
        %1054 = vmatprep.subr.mxu0 0.0
        %1055 = vmatpush1.msra.mxu0 0.0
        %1056 = vmatprep.subr.mxu0 0.0
        %1057 = vmatpush1.msra.mxu0 0.0
        %1058 = vmatprep.subr.mxu0 0.0
        %1059 = vmatpush1.msra.mxu0 0.0
        %1060 = vmatprep.subr.mxu0 0.0
        %1061 = vmatpush1.msra.mxu0 0.0
        %1062 = vmatprep.subr.mxu0 0.0
        %1063 = vmatpush1.msra.mxu0 0.0
        %1064 = vmatprep.subr.mxu0 0.0
        %1065 = vmatpush1.msra.mxu0 0.0
        %1066 = vmatprep.subr.mxu0 0.0
        %1067 = vmatpush1.msra.mxu0 0.0
        %1068 = vmatprep.subr.mxu0 0.0
        %1069 = vmatpush1.msra.mxu0 0.0
        %1070 = vmatprep.subr.mxu0 0.0
        %1071 = vmatpush1.msra.mxu0 0.0
        %1072 = vmatprep.mubr.f32.mxu0 0.0
        %1073 = vmatmul.mubr.f32.gmra.mrb[0].mxu0 %v1006
        %v1074 = vpop.f32.mrb[0].mxu0
        %v1075 = vadd.f32 0.0, %v1074
        %v1076 = vpop.f32.mrb[0].mxu0
        %1077 = vdwg.mxu0
        %v1078 = vadd.f32 %v357, %v1075
        %1079 = vst [vmem:[%s242] sm:$0xff] %v1078
        %s1080 = sand.u32 %s159, 1
        %s1081 = scalar_lea.sflag [#allocation3], %s1080
        %s1082 = sand.u32 %s159, 1
        %s1083 = smul.addr %s1082, 8
        %s1084 = scalar_lea.vmem [#allocation2], %s1083
        // Predicated region
        $region45: #{tpu_custom_call.1} parent=43 // pred_check
          %p1085 = pneg %p169
        $region46: #{tpu_custom_call.1} parent=43 // pred_check_branch
          %1087 = sbr.rel (%p1085) target = $region48
        $region47: #{tpu_custom_call.1} parent=43 // pred_region
          %s1089 = ssub.s32 128, 128
          %1090 = vsyncadd %s1081, %s1089
          %s1091 = smul.addr %s20, 128
          %s1092 = scalar_lea.hbm %s6, %s1091
          %s1094 = sshll.u32 %s1084, 4
          %s1095 = int_to_ptr.vmem [resolvable:$true] %s1094
          %1097 = dma.vmem_to_hbm [thread:$0]  %s1095, 128, %s1092, %s1081
        $region48: #{tpu_custom_call.1} parent=43 // pred_fallthru
          _
      $region44: #{tpu_custom_call.1} parent=5 // pred_fallthru
        _
      %p1098 = scmp.le.s32.totalorder 2, %s15
      // Predicated region
      $region49: #{tpu_custom_call.1} parent=5 // pred_check
        %p1099 = pneg %p1098
      $region50: #{tpu_custom_call.1} parent=5 // pred_check_branch
        %1101 = sbr.rel (%p1099) target = $region52
      $region51: #{tpu_custom_call.1} parent=5 // pred_region
        %s1102 = ssub.s32 %s15, 2
        // Predicated region
        $region53: #{tpu_custom_call.1} parent=51 // pred_check
          %p1103 = pneg %p175
        $region54: #{tpu_custom_call.1} parent=51 // pred_check_branch
          %1105 = sbr.rel (%p1103) target = $region56
        $region55: #{tpu_custom_call.1} parent=51 // pred_region
          %s1106 = sand.u32 %s160, 1
          %s1107 = scalar_lea.sflag [#allocation3], %s1106
          %s1108 = sand.u32 %s160, 1
          %s1109 = smul.addr %s1108, 8
          %s1110 = scalar_lea.vmem [#allocation2], %s1109
          %1111 = dma.done %s1107, 128
        $region56: #{tpu_custom_call.1} parent=51 // pred_fallthru
          _
      $region52: #{tpu_custom_call.1} parent=5 // pred_fallthru
        _
    $region6: #{tpu_custom_call.1} parent=1 // loop_footer
      %s19 = sadd.s32 1, %s15
    $region7: #{tpu_custom_call.1} parent=1 // loop_footer_branch
      %14 = sbr.rel target = $region3
    $region8: #{tpu_custom_call.1} parent=1 // loop_exit
      _
    %1112 = vsyncpa [#allocation3], 1
    %s1113 = scalar_lea.sflag [#allocation3], 1
    %1114 = vsyncpa %s1113, 1

</llo_original>
